<compile_context>
chip_gen: v7x
topology: tpu7x:2x2x1
jax: 0.10.0
libtpu: 0.0.40
codegen_flags: <defaults>
</compile_context>

<pallas_src>
import functools
import math

import jax
import jax.numpy as jnp
from jax import lax
from jax.experimental import pallas as pl
from jax.experimental.pallas import tpu as pltpu


# ---------------------------------------------------------------------------
# Per-generation VMEM budget
# ---------------------------------------------------------------------------
def _vmem_cap_bytes():
    try:
        cap = int(pltpu.get_tpu_info().vmem_capacity_bytes)
        if cap > 0:
            return cap
    except Exception:
        pass
    return 128 << 20  # v5e/v6e default if the query is unavailable


def _vmem_limit_bytes(block_bytes):
    # double-buffered blocks + headroom, capped at 3/4 of physical VMEM:
    # ~96 MiB on 128 MiB parts (v5e/v6e), ~48 MiB on 64 MiB parts (v7x).
    budget = int(0.75 * _vmem_cap_bytes())
    est = 2 * int(block_bytes) + (8 << 20)
    return int(min(max(est, 16 << 20), budget))


# ---------------------------------------------------------------------------
# Kernels
# ---------------------------------------------------------------------------
def _qkv_head_kernel(x_ref, w_ref, b_ref, o_ref):
    # x: [tm, H] bf16   w: [1, H, D] bf16   b: [1, 1, D] f32   o: [1, tm, D] bf16
    acc = jnp.dot(x_ref[...], w_ref[0], preferred_element_type=jnp.float32)
    o_ref[0] = (acc + b_ref[0]).astype(o_ref.dtype)


def _attn_kernel(q_ref, k_ref, v_ref, alibi_ref, o_ref, *, beta):
    # q/k/v: [1, 1, S, D] bf16   alibi: [1, 1, S] f32   o: [1, 1, S, D] bf16
    q = q_ref[0, 0]
    k = k_ref[0, 0]
    v = v_ref[0, 0]
    alibi = alibi_ref[0]                                   # [1, S] -> broadcast rows

    # scores = beta*alibi + (q * 1/sqrt(D)) @ k^T   (scale folded into Wq/bq);
    # explicit contracting dims -> no transposed VMEM copy of k.
    scores = beta * alibi + lax.dot_general(
        q, k, (((1,), (1,)), ((), ())), preferred_element_type=jnp.float32)

    # TODO(synk): additive attention_mask path (module exercised with mask=None)
    # TODO(synk): flash-style (tq, tk) online-softmax tiling for S >= 2048
    #             (full [S, S] tile is fine at small S but not on v7x 64 MiB VMEM).
    m = jnp.max(scores, axis=-1, keepdims=True)
    e = jnp.exp(scores - m)
    denom = jnp.sum(e, axis=-1, keepdims=True)
    probs = (e * pl.reciprocal(denom, approx=True)).astype(v.dtype)  # bf16 for MXU

    ctx = jnp.dot(probs, v, preferred_element_type=jnp.float32)      # [S, D] f32
    o_ref[0, 0] = ctx.astype(o_ref.dtype)


def _dense_residual_kernel(ctx_ref, w_ref, b_ref, r_ref, o_ref, acc_ref):
    # ctx: [1, tm, D] bf16   w: [1, D, H] bf16   b: [1, H] f32
    # r:   [tm, H] f32       o: [tm, H] f32      acc: [tm, H] f32 scratch
    h = pl.program_id(1)

    @pl.when(h == 0)
    def _():
        acc_ref[...] = r_ref[...] + b_ref[...]

    acc_ref[...] += jnp.dot(ctx_ref[0], w_ref[0],
                            preferred_element_type=jnp.float32)

    @pl.when(h == pl.num_programs(1) - 1)
    def _():
        o_ref[...] = acc_ref[...]


# ---------------------------------------------------------------------------
# Pallas-call wrappers
# ---------------------------------------------------------------------------
def _qkv_projection(x2d_bf16, w_qkv, b_qkv, *, tm=256):
    # x: [M, H] bf16   w_qkv: [3NH, H, D] bf16   b_qkv: [3NH, 1, D] f32
    # -> [3NH, M, D] bf16 (head-major; feeds dense per-head attention blocks)
    M, H = x2d_bf16.shape
    n_slots, _, D = w_qkv.shape
    tm = min(tm, M)
    grid = (pl.cdiv(M, tm), n_slots)
    blk_bytes = 2 * tm * H + 2 * H * D + 4 * D + 2 * tm * D
    cost = pl.CostEstimate(
        flops=2 * M * H * n_slots * D, transcendentals=0,
        bytes_accessed=2 * M * H + 2 * H * n_slots * D + 4 * n_slots * D
                       + 2 * M * n_slots * D)
    # TODO(synk): K-tiling (reduction grid axis + accumulator) over H for
    #             Bloom-scale hidden sizes (4k-14k) on v7x's 64 MiB VMEM.
    return pl.pallas_call(
        _qkv_head_kernel,
        grid=grid,
        in_specs=[pl.BlockSpec((tm, H), lambda i, j: (i, 0)),       # resident over j
                  pl.BlockSpec((1, H, D), lambda i, j: (j, 0, 0)),
                  pl.BlockSpec((1, 1, D), lambda i, j: (j, 0, 0))],
        out_specs=pl.BlockSpec((1, tm, D), lambda i, j: (j, i, 0)),
        out_shape=jax.ShapeDtypeStruct((n_slots, M, D), jnp.bfloat16),
        compiler_params=pltpu.CompilerParams(
            dimension_semantics=("parallel", "parallel"),
            vmem_limit_bytes=_vmem_limit_bytes(blk_bytes)),
        cost_estimate=cost,
    )(x2d_bf16, w_qkv, b_qkv)


def _attention(qkv4, alibi, *, batch, seq, num_heads, head_dim, beta):
    # qkv4: [3NH, B, S, D] bf16   alibi: [B*NH, 1, S] f32  ->  [NH, B, S, D] bf16
    NH, D, S = num_heads, head_dim, seq
    kernel = functools.partial(_attn_kernel, beta=beta)
    blk_bytes = 3 * 2 * S * D + 4 * S + 4 * S * S + 2 * S * D   # real per-step set
    cost = pl.CostEstimate(
        flops=4 * batch * NH * S * S * D,
        transcendentals=batch * NH * S * S,
        bytes_accessed=3 * 2 * batch * NH * S * D + 4 * batch * NH * S
                       + 2 * batch * NH * S * D)
    return pl.pallas_call(
        kernel,
        grid=(batch, num_heads),
        in_specs=[
            pl.BlockSpec((1, 1, S, D), lambda b, h: (h, b, 0, 0)),           # q
            pl.BlockSpec((1, 1, S, D), lambda b, h: (NH + h, b, 0, 0)),      # k
            pl.BlockSpec((1, 1, S, D), lambda b, h: (2 * NH + h, b, 0, 0)),  # v
            pl.BlockSpec((1, 1, S), lambda b, h: (b * NH + h, 0, 0)),        # alibi
        ],
        out_specs=pl.BlockSpec((1, 1, S, D), lambda b, h: (h, b, 0, 0)),
        out_shape=jax.ShapeDtypeStruct((NH, batch, S, D), jnp.bfloat16),
        compiler_params=pltpu.CompilerParams(
            dimension_semantics=("parallel", "parallel"),
            vmem_limit_bytes=_vmem_limit_bytes(blk_bytes)),
        cost_estimate=cost,
    )(qkv4, qkv4, qkv4, alibi)


def _dense_residual(ctx3, wd3, bd2, res2d, *, tm=256):
    # ctx3: [NH, M, D] bf16   wd3: [NH, D, H] bf16   bd2: [1, H] f32
    # res2d: [M, H] f32  ->  [M, H] f32      (merge-heads fused as reduction)
    NH, M, D = ctx3.shape
    H = wd3.shape[2]
    tm = min(tm, M)
    grid = (pl.cdiv(M, tm), NH)          # heads = reduction axis, innermost
    blk_bytes = 2 * tm * D + 2 * D * H + 4 * H + 4 * tm * H + 4 * tm * H + 4 * tm * H
    cost = pl.CostEstimate(
        flops=2 * M * H * NH * D, transcendentals=0,
        bytes_accessed=2 * NH * M * D + 2 * NH * D * H + 4 * H + 2 * 4 * M * H)
    return pl.pallas_call(
        _dense_residual_kernel,
        grid=grid,
        in_specs=[pl.BlockSpec((1, tm, D), lambda i, h: (h, i, 0)),
                  pl.BlockSpec((1, D, H), lambda i, h: (h, 0, 0)),
                  pl.BlockSpec((1, H), lambda i, h: (0, 0)),
                  pl.BlockSpec((tm, H), lambda i, h: (i, 0))],      # resident over h
        out_specs=pl.BlockSpec((tm, H), lambda i, h: (i, 0)),
        out_shape=jax.ShapeDtypeStruct((M, H), jnp.float32),
        scratch_shapes=[pltpu.VMEM((tm, H), jnp.float32)],
        compiler_params=pltpu.CompilerParams(
            dimension_semantics=("parallel", "arbitrary"),
            vmem_limit_bytes=_vmem_limit_bytes(blk_bytes)),
        cost_estimate=cost,
    )(ctx3, wd3, bd2, res2d)


# ---------------------------------------------------------------------------
# One-time parameter preparation (hoisted out of the traced forward)
# ---------------------------------------------------------------------------
def prepare_params(params, num_heads):
    H = params["wq"].shape[0]
    assert H % num_heads == 0
    D = H // num_heads
    inv_norm = 1.0 / math.sqrt(D)

    def split_w(w):                      # [H, H] -> [NH, H, D] (head-major cols)
        return jnp.transpose(w.reshape(H, num_heads, D), (1, 0, 2))

    def split_b(b):                      # [H] -> [NH, 1, D]
        return b.reshape(num_heads, 1, D)

    w_qkv = jnp.concatenate(
        [split_w(params["wq"] * inv_norm), split_w(params["wk"]),
         split_w(params["wv"])], axis=0).astype(jnp.bfloat16)        # [3NH, H, D]
    b_qkv = jnp.concatenate(
        [split_b(params["bq"] * inv_norm), split_b(params["bk"]),
         split_b(params["bv"])], axis=0).astype(jnp.float32)         # [3NH, 1, D]

    wd3 = params["wd"].astype(jnp.bfloat16).reshape(num_heads, D, H)  # [NH, D, H]
    bd2 = params["bd"].astype(jnp.float32).reshape(1, H)              # [1, H]
    return {"w_qkv": w_qkv, "b_qkv": b_qkv, "wd": wd3, "bd": bd2}


# ---------------------------------------------------------------------------
# Full forward
# ---------------------------------------------------------------------------
def bloom_attention_forward(prepared, hidden_states, residual, alibi,
                            attention_mask=None, *, num_heads, beta=1.0):
    # TODO(synk): additive attention_mask path (module exercised with mask=None);
    #             attention_dropout / hidden_dropout are identity at inference.
    B, S, H = hidden_states.shape
    D = H // num_heads

    x2d = hidden_states.reshape(B * S, H).astype(jnp.bfloat16)       # bf16 MXU input
    qkv = _qkv_projection(x2d, prepared["w_qkv"], prepared["b_qkv"])  # [3NH, B*S, D]
    qkv4 = qkv.reshape(3 * num_heads, B, S, D)                        # free reshape

    ctx = _attention(qkv4, alibi, batch=B, seq=S, num_heads=num_heads,
                     head_dim=D, beta=beta)                           # [NH, B, S, D]
    ctx3 = ctx.reshape(num_heads, B * S, D)                           # free reshape

    out = _dense_residual(ctx3, prepared["wd"], prepared["bd"],
                          residual.reshape(B * S, H).astype(jnp.float32))
    return out.reshape(B, S, H)


# ---------------------------------------------------------------------------
# Pure-JAX reference (f32, mirrors the PyTorch module)
# ---------------------------------------------------------------------------
def _reference(params, x, res, alibi, num_heads, beta=1.0):
    B, S, H = x.shape
    D = H // num_heads
    inv = 1.0 / math.sqrt(D)
    q = (x @ params["wq"] + params["bq"]).reshape(B, S, num_heads, D).transpose(0, 2, 1, 3)
    k = (x @ params["wk"] + params["bk"]).reshape(B, S, num_heads, D).transpose(0, 2, 1, 3)
    v = (x @ params["wv"] + params["bv"]).reshape(B, S, num_heads, D).transpose(0, 2, 1, 3)
    scores = beta * alibi.reshape(B, num_heads, 1, S) + inv * jnp.einsum(
        "bhqd,bhkd->bhqk", q, k)
    probs = jax.nn.softmax(scores, axis=-1)
    ctx = jnp.einsum("bhqk,bhkd->bhqd", probs, v)
    ctx = ctx.transpose(0, 2, 1, 3).reshape(B, S, H)
    return ctx @ params["wd"] + params["bd"] + res


# ---------------------------------------------------------------------------
# Deterministic params + example run
# ---------------------------------------------------------------------------
if __name__ == "__main__":
    B, S, H, NH = 2, 8, 32, 4  # batch, seq, hidden, num_heads (head_dim = 8)

    key = jax.random.PRNGKey(0)
    ks = jax.random.split(key, 12)
    bound = 1.0 / math.sqrt(H)  # nn.Linear-style uniform init

    # Weights stored as [in, out] (i.e. torch_weight.T), initialized in-script.
    params = {
        "wq": jax.random.uniform(ks[0], (H, H), jnp.float32, -bound, bound),
        "bq": jax.random.uniform(ks[1], (H,), jnp.float32, -bound, bound),
        "wk": jax.random.uniform(ks[2], (H, H), jnp.float32, -bound, bound),
        "bk": jax.random.uniform(ks[3], (H,), jnp.float32, -bound, bound),
        "wv": jax.random.uniform(ks[4], (H, H), jnp.float32, -bound, bound),
        "bv": jax.random.uniform(ks[5], (H,), jnp.float32, -bound, bound),
        "wd": jax.random.uniform(ks[6], (H, H), jnp.float32, -bound, bound),
        "bd": jax.random.uniform(ks[7], (H,), jnp.float32, -bound, bound),
    }

    hidden_states = jax.random.normal(ks[8], (B, S, H), jnp.float32)
    residual = jax.random.normal(ks[9], (B, S, H), jnp.float32)
    # Bloom alibi bias: [batch * num_heads, 1, seq] (batch-major, HF layout)
    alibi = 0.1 * jax.random.normal(ks[10], (B * NH, 1, S), jnp.float32)

    prepared = prepare_params(params, NH)  # one-time weight prep (not in forward)

    out = bloom_attention_forward(prepared, hidden_states, residual, alibi,
                                  num_heads=NH)
    jax.block_until_ready(out)
    assert out.shape == (B, S, H)

    ref = _reference(params, hidden_states, residual, alibi, NH)
    err = float(jnp.max(jnp.abs(out - ref)))
    assert err < 0.1, f"max abs error vs f32 reference too large: {err}"

    print("KERNEL_OK")
</pallas_src>

<mosaic_0001>
module attributes {stable_mosaic.version = 11 : i64} {
  func.func @_qkv_head_kernel(%arg0: i32, %arg1: i32, %arg2: memref<16x32xbf16, #tpu.memory_space<vmem>>, %arg3: memref<1x32x8xbf16, #tpu.memory_space<vmem>>, %arg4: memref<1x1x8xf32, #tpu.memory_space<vmem>>, %arg5: memref<1x16x8xbf16, #tpu.memory_space<vmem>>) attributes {dimension_semantics = [#tpu.dimension_semantics<parallel>, #tpu.dimension_semantics<parallel>], iteration_bounds = array<i64: 1, 12>, scalar_prefetch = 0 : i64, scratch_operands = 0 : i64, tpu.core_type = #tpu.core_type<tc>, window_params = [{transform_indices = @transform_0, window_bounds = array<i64: 16, 32>}, {transform_indices = @transform_1, window_bounds = array<i64: 1, 32, 8>}, {transform_indices = @transform_2, window_bounds = array<i64: 1, 1, 8>}, {transform_indices = @transform_3, window_bounds = array<i64: 1, 16, 8>}]} {
    %c0 = arith.constant 0 : index
    %c0_0 = arith.constant 0 : index
    %0 = vector.load %arg2[%c0, %c0_0] : memref<16x32xbf16, #tpu.memory_space<vmem>>, vector<16x32xbf16>
    %c0_1 = arith.constant 0 : index
    %c0_2 = arith.constant 0 : index
    %c0_3 = arith.constant 0 : index
    %1 = vector.load %arg3[%c0_1, %c0_2, %c0_3] : memref<1x32x8xbf16, #tpu.memory_space<vmem>>, vector<1x32x8xbf16>
    %2 = vector.shape_cast %1 : vector<1x32x8xbf16> to vector<32x8xbf16>
    %cst = arith.constant dense<0.000000e+00> : vector<16x8xf32>
    %3 = tpu.matmul %0, %2, %cst {dimension_numbers = #tpu.dot_dimension_numbers<[1], [0], [0], [1], [0, 0, 1, 1], [], []>} : vector<16x32xbf16>, vector<32x8xbf16>, vector<16x8xf32> -> vector<16x8xf32>
    %c0_4 = arith.constant 0 : index
    %c0_5 = arith.constant 0 : index
    %c0_6 = arith.constant 0 : index
    %4 = vector.load %arg4[%c0_4, %c0_5, %c0_6] : memref<1x1x8xf32, #tpu.memory_space<vmem>>, vector<1x1x8xf32>
    %5 = vector.shape_cast %4 : vector<1x1x8xf32> to vector<1x8xf32>
    %6 = vector.broadcast %5 : vector<1x8xf32> to vector<16x8xf32>
    %7 = arith.addf %3, %6 : vector<16x8xf32>
    %8 = arith.truncf %7 : vector<16x8xf32> to vector<16x8xbf16>
    %c0_7 = arith.constant 0 : index
    %c0_8 = arith.constant 0 : index
    %c0_9 = arith.constant 0 : index
    %9 = vector.load %arg5[%c0_7, %c0_8, %c0_9] : memref<1x16x8xbf16, #tpu.memory_space<vmem>>, vector<1x16x8xbf16>
    %10 = vector.shape_cast %9 : vector<1x16x8xbf16> to vector<16x8xbf16>
    %11 = vector.shape_cast %8 : vector<16x8xbf16> to vector<1x16x8xbf16>
    tpu.vector_store %arg5[%c0_7, %c0_8, %c0_9], %11 {strides = array<i32>} : memref<1x16x8xbf16, #tpu.memory_space<vmem>>, vector<1x16x8xbf16>,
    return
  }
  func.func @transform_0(%arg0: i32, %arg1: i32) -> (i32, i32) {
    %c0_i32 = arith.constant 0 : i32
    %c0_i32_0 = arith.constant 0 : i32
    return %arg0, %c0_i32 : i32, i32
  }
  func.func @transform_1(%arg0: i32, %arg1: i32) -> (i32, i32, i32) {
    %c0_i32 = arith.constant 0 : i32
    %c0_i32_0 = arith.constant 0 : i32
    %c0_i32_1 = arith.constant 0 : i32
    return %arg1, %c0_i32, %c0_i32_0 : i32, i32, i32
  }
  func.func @transform_2(%arg0: i32, %arg1: i32) -> (i32, i32, i32) {
    %c0_i32 = arith.constant 0 : i32
    %c0_i32_0 = arith.constant 0 : i32
    %c0_i32_1 = arith.constant 0 : i32
    return %arg1, %c0_i32, %c0_i32_0 : i32, i32, i32
  }
  func.func @transform_3(%arg0: i32, %arg1: i32) -> (i32, i32, i32) {
    %c0_i32 = arith.constant 0 : i32
    %c0_i32_0 = arith.constant 0 : i32
    return %arg1, %arg0, %c0_i32 : i32, i32, i32
  }
}

</mosaic_0001>

<llo_original>
// kernel: tpu_custom_call.1
$region0: #{tpu_custom_call.1}
  #allocation0 [shape = 'u32[]', space=smem, size = 0x4, offset = 0x4, fixed_abs, tag = 'smem constant byte address 0x4 - core index']
  #allocation1 [shape = 'u32[144,128]{1,0:T(1,128)}', space=vmem, size = 0x12000, scoped, tag = 'internal scratch']
  %s0 = inlined_call_operand.vmem [shape: bf16[16,32], index: 0, kind: input, shape index: {}]
  %s1 = inlined_call_operand.vmem [shape: bf16[12,32,8], index: 1, kind: input, shape index: {}]
  %s2 = inlined_call_operand.vmem [shape: f32[12,1,8], index: 2, kind: input, shape index: {}]
  %s3 = inlined_call_operand.vmem [shape: bf16[12,16,8], index: 3, kind: output, shape index: {}]
  %s4 = sld [smem:[#allocation0]]
  $region45: #{tpu_custom_call.1} parent=0
    _
  %s6 = ssub.s32 1, %s4
  %s7 = scalar_select 0, %s6, %s4
  loop: start=0, step=1, limit=14
  $region2: #{tpu_custom_call.1} parent=0 // loop_pre_header
    _
  $region3: #{tpu_custom_call.1} parent=0 // loop_header
    %s9 = sphi 0, %s13
    %p10 = scmp.ge.s32.totalorder %s9, 14
    %s16 = sphi 0, %s28
    %s17 = sphi 0, %s24
    %s18 = sphi 0, %s16
    %s19 = sphi 0, %s17
    %s20 = sphi 0, %s18
    %s21 = sphi 0, %s19
    %s31 = sphi 0, %s33
    %s34 = sphi 0, %s31
    %s35 = sphi 0, %s34
    %s51 = sphi 0, %s35
    %s57 = sphi 0, %s59
    %s60 = sphi 0, %s57
    %s61 = sphi 0, %s60
    %s77 = sphi 0, %s61
    %s83 = sphi 0, %s85
    %s86 = sphi 0, %s83
    %s87 = sphi 0, %s86
    %s103 = sphi 0, %s87
    %s111 = sphi 0, %s113
    %s114 = sphi 0, %s111
    %s115 = sphi 0, %s114
    %s131 = sphi 0, %s115
  $region4: #{tpu_custom_call.1} parent=0 // loop_header_branch
    %12 = sbr.rel (%p10) target = $region8
  $region5: #{tpu_custom_call.1} parent=0 // loop_body
    %s14 = ssub.s32 %s9, 1
    %s15 = ssub.s32 %s9, 2
    %s22 = sadd.s32 1, %s17
    %p23 = scmp.ge.s32.totalorder %s22, 12
    %s24 = scalar_select %p23, 0, %s22
    %s25 = sadd.s32 1, %s16
    %s26 = scalar_select %p23, %s25, %s16
    %p27 = scmp.ge.s32.totalorder %s26, 1
    %s28 = scalar_select %p27, 0, %s26
    %s29 = ssub.s32 %s16, %s28
    %p30 = scmp.eq.s32.totalorder %s29, 0
    %s32 = sadd.s32 %s31, 1
    %s33 = scalar_select %p30, %s31, %s32
    %p36 = pneg %p30
    %p37 = scmp.eq.s32.totalorder %s9, 11
    %p38 = por %p36, %p37
    %p39 = scmp.ne.s32.totalorder %s31, %s34
    %p40 = scmp.eq.s32.totalorder %s9, 0
    %p41 = por %p39, %p40
    %p42 = scmp.ne.s32.totalorder %s31, %s34
    %p43 = scmp.eq.s32.totalorder %s14, 11
    %p44 = por %p42, %p43
    %p45 = scmp.ne.s32.totalorder %s34, %s35
    %p46 = scmp.eq.s32.totalorder %s14, 0
    %p47 = por %p45, %p46
    %p48 = scmp.ne.s32.totalorder %s34, %s35
    %p49 = scmp.eq.s32.totalorder %s15, 11
    %p50 = por %p48, %p49
    %p52 = scmp.ne.s32.totalorder %s35, %s51
    %p53 = scmp.eq.s32.totalorder %s15, 0
    %p54 = por %p52, %p53
    %s55 = ssub.s32 %s17, %s24
    %p56 = scmp.eq.s32.totalorder %s55, 0
    %s58 = sadd.s32 %s57, 1
    %s59 = scalar_select %p56, %s57, %s58
    %p62 = pneg %p56
    %p63 = scmp.eq.s32.totalorder %s9, 11
    %p64 = por %p62, %p63
    %p65 = scmp.ne.s32.totalorder %s57, %s60
    %p66 = scmp.eq.s32.totalorder %s9, 0
    %p67 = por %p65, %p66
    %p68 = scmp.ne.s32.totalorder %s57, %s60
    %p69 = scmp.eq.s32.totalorder %s14, 11
    %p70 = por %p68, %p69
    %p71 = scmp.ne.s32.totalorder %s60, %s61
    %p72 = scmp.eq.s32.totalorder %s14, 0
    %p73 = por %p71, %p72
    %p74 = scmp.ne.s32.totalorder %s60, %s61
    %p75 = scmp.eq.s32.totalorder %s15, 11
    %p76 = por %p74, %p75
    %p78 = scmp.ne.s32.totalorder %s61, %s77
    %p79 = scmp.eq.s32.totalorder %s15, 0
    %p80 = por %p78, %p79
    %s81 = ssub.s32 %s17, %s24
    %p82 = scmp.eq.s32.totalorder %s81, 0
    %s84 = sadd.s32 %s83, 1
    %s85 = scalar_select %p82, %s83, %s84
    %p88 = pneg %p82
    %p89 = scmp.eq.s32.totalorder %s9, 11
    %p90 = por %p88, %p89
    %p91 = scmp.ne.s32.totalorder %s83, %s86
    %p92 = scmp.eq.s32.totalorder %s9, 0
    %p93 = por %p91, %p92
    %p94 = scmp.ne.s32.totalorder %s83, %s86
    %p95 = scmp.eq.s32.totalorder %s14, 11
    %p96 = por %p94, %p95
    %p97 = scmp.ne.s32.totalorder %s86, %s87
    %p98 = scmp.eq.s32.totalorder %s14, 0
    %p99 = por %p97, %p98
    %p100 = scmp.ne.s32.totalorder %s86, %s87
    %p101 = scmp.eq.s32.totalorder %s15, 11
    %p102 = por %p100, %p101
    %p104 = scmp.ne.s32.totalorder %s87, %s103
    %p105 = scmp.eq.s32.totalorder %s15, 0
    %p106 = por %p104, %p105
    %s107 = ssub.s32 %s17, %s24
    %s108 = ssub.s32 %s16, %s28
    %s109 = sor.u32 %s107, %s108
    %p110 = scmp.eq.s32.totalorder %s109, 0
    %s112 = sadd.s32 %s111, 1
    %s113 = scalar_select %p110, %s111, %s112
    %p116 = pneg %p110
    %p117 = scmp.eq.s32.totalorder %s9, 11
    %p118 = por %p116, %p117
    %p119 = scmp.ne.s32.totalorder %s111, %s114
    %p120 = scmp.eq.s32.totalorder %s9, 0
    %p121 = por %p119, %p120
    %p122 = scmp.ne.s32.totalorder %s111, %s114
    %p123 = scmp.eq.s32.totalorder %s14, 11
    %p124 = por %p122, %p123
    %p125 = scmp.ne.s32.totalorder %s114, %s115
    %p126 = scmp.eq.s32.totalorder %s14, 0
    %p127 = por %p125, %p126
    %p128 = scmp.ne.s32.totalorder %s114, %s115
    %p129 = scmp.eq.s32.totalorder %s15, 11
    %p130 = por %p128, %p129
    %p132 = scmp.ne.s32.totalorder %s115, %s131
    %p133 = scmp.eq.s32.totalorder %s15, 0
    %p134 = por %p132, %p133
    %p135 = scmp.le.s32.totalorder 1, %s9
    %p136 = scmp.lt.s32.totalorder %s9, 13
    %p137 = pnand %p135, %p136
    %p138 = pneg %p137
    // Predicated region
    $region9: #{tpu_custom_call.1} parent=5 // pred_check
      _
    $region10: #{tpu_custom_call.1} parent=5 // pred_check_branch
      %140 = sbr.rel (%p137) target = $region12
    $region11: #{tpu_custom_call.1} parent=5 // pred_region
      %s141 = ssub.s32 %s9, 1
      // Predicated region
      $region13: #{tpu_custom_call.1} parent=11 // pred_check
        %p142 = pneg %p47
      $region14: #{tpu_custom_call.1} parent=11 // pred_check_branch
        %144 = sbr.rel (%p142) target = $region16
      $region15: #{tpu_custom_call.1} parent=11 // pred_region
        %s145 = smul.u32 2, %s18
        %p146 = scmp.lt.s32.totalorder %s145, 1
        %s147 = scalar_select %p146, %s145, 1
        %s148 = smul.addr %s147, 4
        %s149 = scalar_lea.vmem %s0, %s148
        %s150 = smul.u32 2, %s18
      $region16: #{tpu_custom_call.1} parent=11 // pred_fallthru
        _
    $region12: #{tpu_custom_call.1} parent=5 // pred_fallthru
      _
    %p151 = scmp.lt.s32.totalorder %s9, 12
    // Predicated region
    $region17: #{tpu_custom_call.1} parent=5 // pred_check
      %p152 = pneg %p151
    $region18: #{tpu_custom_call.1} parent=5 // pred_check_branch
      %154 = sbr.rel (%p152) target = $region20
    $region19: #{tpu_custom_call.1} parent=5 // pred_region
      // Predicated region
      $region21: #{tpu_custom_call.1} parent=19 // pred_check
        %p155 = pneg %p67
      $region22: #{tpu_custom_call.1} parent=19 // pred_check_branch
        %157 = sbr.rel (%p155) target = $region24
      $region23: #{tpu_custom_call.1} parent=19 // pred_region
        %p158 = scmp.lt.s32.totalorder %s17, 11
        %s159 = scalar_select %p158, %s17, 11
        %s160 = smul.addr %s159, 4
        %s161 = smul.addr %s160, 4
        %s162 = scalar_lea.vmem %s1, %s161
      $region24: #{tpu_custom_call.1} parent=19 // pred_fallthru
        _
      // Predicated region
      $region25: #{tpu_custom_call.1} parent=19 // pred_check
        %p163 = pneg %p93
      $region26: #{tpu_custom_call.1} parent=19 // pred_check_branch
        %165 = sbr.rel (%p163) target = $region28
      $region27: #{tpu_custom_call.1} parent=19 // pred_region
        %p166 = scmp.lt.s32.totalorder %s17, 11
        %s167 = scalar_select %p166, %s17, 11
        %s168 = scalar_lea.vmem %s2, %s167
      $region28: #{tpu_custom_call.1} parent=19 // pred_fallthru
        _
    $region20: #{tpu_custom_call.1} parent=5 // pred_fallthru
      _
    %p169 = scmp.le.s32.totalorder 1, %s9
    %p170 = scmp.lt.s32.totalorder %s9, 13
    %p171 = pnand %p169, %p170
    %p172 = pneg %p171
    // Predicated region
    $region29: #{tpu_custom_call.1} parent=5 // pred_check
      _
    $region30: #{tpu_custom_call.1} parent=5 // pred_check_branch
      %174 = sbr.rel (%p171) target = $region32
    $region31: #{tpu_custom_call.1} parent=5 // pred_region
      %s175 = ssub.s32 %s9, 1
      %s176 = smul.u32 2, %s18
      %p177 = scmp.lt.s32.totalorder %s176, 1
      %s178 = scalar_select %p177, %s176, 1
      %s179 = smul.addr %s178, 4
      %s180 = scalar_lea.vmem %s0, %s179
      %p181 = pneg %p47
      %p182 = pneg %p44
      %p183 = scmp.lt.s32.totalorder %s19, 11
      %s184 = scalar_select %p183, %s19, 11
      %s185 = smul.addr %s184, 4
      %s186 = smul.addr %s185, 4
      %s187 = scalar_lea.vmem %s1, %s186
      %p188 = pneg %p73
      %p189 = pneg %p70
      %p190 = scmp.lt.s32.totalorder %s19, 11
      %s191 = scalar_select %p190, %s19, 11
      %s192 = scalar_lea.vmem %s2, %s191
      %p193 = pneg %p99
      %p194 = pneg %p96
      %p195 = pneg %p127
      %p196 = pneg %p124
      %s197 = smul.u32 2, %s18
      %p198 = scmp.lt.s32.totalorder %s19, 11
      %s199 = scalar_select %p198, %s19, 11
      %p200 = scmp.lt.s32.totalorder %s197, 1
      %s201 = scalar_select %p200, %s197, 1
      %s202 = smul.addr %s199, 2
      %s203 = sadd.s32 %s201, %s202
      %s204 = smul.addr %s203, 4
      %s205 = scalar_lea.vmem %s3, %s204
      %s206 = smul.u32 2, %s18
      %p207 = scmp.lt.s32.totalorder %s206, 1
      %s208 = scalar_select %p207, %s206, 1
      %s209 = smul.addr %s208, 4
      %s210 = scalar_lea.vmem %s0, %s209
      %s211 = smul.u32 2, %s18
      %p212 = scmp.lt.s32.totalorder %s19, 11
      %s213 = scalar_select %p212, %s19, 11
      %s214 = smul.addr %s213, 4
      %s215 = smul.addr %s214, 4
      %s216 = scalar_lea.vmem %s1, %s215
      %p217 = scmp.lt.s32.totalorder %s19, 11
      %s218 = scalar_select %p217, %s19, 11
      %s219 = scalar_lea.vmem %s2, %s218
      %s220 = smul.u32 2, %s18
      %p221 = scmp.lt.s32.totalorder %s19, 11
      %s222 = scalar_select %p221, %s19, 11
      %p223 = scmp.lt.s32.totalorder %s220, 1
      %s224 = scalar_select %p223, %s220, 1
      %s225 = smul.addr %s222, 2
      %s226 = sadd.s32 %s224, %s225
      %s227 = smul.addr %s226, 4
      %s228 = scalar_lea.vmem %s3, %s227
      %s229 = smul.u32 2, %s18
      %v231 = vld [vmem:[%s210] sm:$0xf]
      %v232 = vld [vmem:[%s210 + $0x4] sm:$0xf]
      %v233 = vld [vmem:[%s216] sm:$0xf]
      %v234 = vld [vmem:[%s216 + $0x4] sm:$0xf]
      %v235 = vld [vmem:[%s216 + $0x8] sm:$0xf]
      %v236 = vld [vmem:[%s216 + $0xc] sm:$0xf]
      %v237 = vld [vmem:[%s219] sm:$0x1]
      %v239 = vlaneseq
      %v240 = vshrl.u32 %v239, 7
      %v241 = vsub.s32 0, %v240
      %v242 = vrot.slane %v237, %v241
      %v246 = vunpack.c.l.b16 %v231
      %v247 = vunpack.c.l.b16 %v232
      %v248 = vpack.c.b16 %v247, %v246
      %v253 = vunpack.c.l.b16 %v233
      %v254 = vunpack.c.l.b16 %v234
      %v255 = vunpack.c.l.b16 %v235
      %v256 = vunpack.c.l.b16 %v236
      %v257 = vpack.c.b16 %v254, %v253
      %v258 = vpack.c.b16 %v256, %v255
      %vm261 = vcmask 261120
      %v263 = vsel %vm261, %v248, 0
      %265 = vmatprep.subr.bf16.mxu0 0
      %266 = vmatpush1.bf16.msra.mxu0 %v257
      %267 = vmatprep.subr.bf16.mxu0 0
      %268 = vmatpush1.bf16.msra.mxu0 %v258
      %269 = vmatprep.subr.bf16.mxu0 0
      %270 = vmatpush1.bf16.msra.mxu0 0
      %271 = vmatprep.subr.bf16.mxu0 0
      %272 = vmatpush1.bf16.msra.mxu0 0
      %273 = vmatprep.subr.bf16.mxu0 0
      %274 = vmatpush1.bf16.msra.mxu0 0
      %275 = vmatprep.subr.bf16.mxu0 0
      %276 = vmatpush1.bf16.msra.mxu0 0
      %277 = vmatprep.subr.bf16.mxu0 0
      %278 = vmatpush1.bf16.msra.mxu0 0
      %279 = vmatprep.subr.bf16.mxu0 0
      %280 = vmatpush1.bf16.msra.mxu0 0
      %281 = vmatprep.subr.bf16.mxu0 0
      %282 = vmatpush1.bf16.msra.mxu0 0
      %283 = vmatprep.subr.bf16.mxu0 0
      %284 = vmatpush1.bf16.msra.mxu0 0
      %285 = vmatprep.subr.bf16.mxu0 0
      %286 = vmatpush1.bf16.msra.mxu0 0
      %287 = vmatprep.subr.bf16.mxu0 0
      %288 = vmatpush1.bf16.msra.mxu0 0
      %289 = vmatprep.subr.bf16.mxu0 0
      %290 = vmatpush1.bf16.msra.mxu0 0
      %291 = vmatprep.subr.bf16.mxu0 0
      %292 = vmatpush1.bf16.msra.mxu0 0
      %293 = vmatprep.subr.bf16.mxu0 0
      %294 = vmatpush1.bf16.msra.mxu0 0
      %295 = vmatprep.subr.bf16.mxu0 0
      %296 = vmatpush1.bf16.msra.mxu0 0
      %297 = vmatprep.mubr.bf16.mxu0 0
      %298 = vmatmul.mubr.bf16.gmra.mrb[0].mxu0 %v263
      %v299 = vpop.f32.mrb[0].mxu0
      %v300 = vadd.f32 %v242, %v299
      %v301 = vpop.f32.mrb[0].mxu0
      %v302 = vpop.f32.mrb[0].mxu0
      %v303 = vadd.f32 %v242, %v302
      %v304 = vpop.f32.mrb[0].mxu0
      %305 = vdwg.mxu0
      %v306 = vpack.c.bf16 %v303, %v300
      %v308 = vunpack.c.l.b16 %v306
      %v309 = vunpack.c.h.b16 %v306
      %v310 = vpack.c.b16 %v308, %v308
      %v311 = vpack.c.b16 %v309, %v309
      %vm314 = vcmask 60416
      %315 = vst.msk [vmem:[%s228] sm:$0xf] %vm314, %v310
      %316 = vst.msk [vmem:[%s228 + $0x4] sm:$0xf] %vm314, %v311
      %s317 = smul.u32 2, %s18
      %p318 = scmp.lt.s32.totalorder %s19, 11
      %s319 = scalar_select %p318, %s19, 11
      %p320 = scmp.lt.s32.totalorder %s317, 1
      %s321 = scalar_select %p320, %s317, 1
      %s322 = smul.addr %s319, 2
      %s323 = sadd.s32 %s321, %s322
      %s324 = smul.addr %s323, 4
      %s325 = scalar_lea.vmem %s3, %s324
      // Predicated region
      $region33: #{tpu_custom_call.1} parent=31 // pred_check
        %p326 = pneg %p124
      $region34: #{tpu_custom_call.1} parent=31 // pred_check_branch
        %328 = sbr.rel (%p326) target = $region36
      $region35: #{tpu_custom_call.1} parent=31 // pred_region
        %s329 = smul.u32 2, %s18
      $region36: #{tpu_custom_call.1} parent=31 // pred_fallthru
        _
    $region32: #{tpu_custom_call.1} parent=5 // pred_fallthru
      _
    %p330 = scmp.le.s32.totalorder 2, %s9
    // Predicated region
    $region37: #{tpu_custom_call.1} parent=5 // pred_check
      %p331 = pneg %p330
    $region38: #{tpu_custom_call.1} parent=5 // pred_check_branch
      %333 = sbr.rel (%p331) target = $region40
    $region39: #{tpu_custom_call.1} parent=5 // pred_region
      %s334 = ssub.s32 %s9, 2
      // Predicated region
      $region41: #{tpu_custom_call.1} parent=39 // pred_check
        %p335 = pneg %p130
      $region42: #{tpu_custom_call.1} parent=39 // pred_check_branch
        %337 = sbr.rel (%p335) target = $region44
      $region43: #{tpu_custom_call.1} parent=39 // pred_region
        %s338 = smul.u32 2, %s20
        %p339 = scmp.lt.s32.totalorder %s21, 11
        %s340 = scalar_select %p339, %s21, 11
        %p341 = scmp.lt.s32.totalorder %s338, 1
        %s342 = scalar_select %p341, %s338, 1
        %s343 = smul.addr %s340, 2
        %s344 = sadd.s32 %s342, %s343
        %s345 = smul.addr %s344, 4
        %s346 = scalar_lea.vmem %s3, %s345
      $region44: #{tpu_custom_call.1} parent=39 // pred_fallthru
        _
    $region40: #{tpu_custom_call.1} parent=5 // pred_fallthru
      _
  $region6: #{tpu_custom_call.1} parent=0 // loop_footer
    %s13 = sadd.s32 1, %s9
  $region7: #{tpu_custom_call.1} parent=0 // loop_footer_branch
    %8 = sbr.rel target = $region3
  $region8: #{tpu_custom_call.1} parent=0 // loop_exit
    _

</llo_original>
